<compile_context>
chip_gen: v7x
topology: tpu7x:2x2x1
jax: 0.10.0
libtpu: 0.0.40
codegen_flags: <defaults>
</compile_context>

<pallas_src>
import jax
import jax.numpy as jnp
from jax.experimental import pallas as pl
from jax.experimental.pallas import tpu as pltpu


def _worker_lstm_kernel(x_ref, h0_ref, c0_ref, wih_ref, whh_ref, b_ref,
                        g_ref, hn_ref, cn_ref):
    """Single-invocation LSTM + fused L1-normalization kernel.

    Ref shapes:
      x_ref   : (T*B, G)   flattened inputs (time-major)
      h0_ref  : (B, G)     initial hidden
      c0_ref  : (B, G)     initial cell
      wih_ref : (G, 4G)    W_ih^T  (PyTorch gate order i, f, g, o)
      whh_ref : (G, 4G)    W_hh^T
      b_ref   : (1, 4G)    b_ih + b_hh
      g_ref   : (T*B, G)   normalized output (dense slab)
      hn_ref  : (B, G)     final hidden
      cn_ref  : (B, G)     final cell
    """
    TB, G = x_ref.shape
    B = h0_ref.shape[0]
    T = TB // B

    # --- Hoisted input projection: one MXU matmul for all T steps, kept in
    # vregs ((8,128) f32 == exactly one vreg at the test size). --------------
    gx = jnp.dot(x_ref[...], wih_ref[...],
                 preferred_element_type=jnp.float32) + b_ref[...]   # (T*B, 4G)

    # Hoist the recurrent weight load off the serial path.
    whh = whh_ref[...]                                              # (G, 4G)

    h = h0_ref[...].astype(jnp.float32)                             # (B, G)
    c = c0_ref[...].astype(jnp.float32)                             # (B, G)

    # --- Serial LSTM recurrence (fully unrolled; T is small, slices static) -
    for t in range(T):
        gates = gx[t * B:(t + 1) * B, :] + jnp.dot(
            h, whh, preferred_element_type=jnp.float32)             # (B, 4G)
        # Full-vreg activation passes, then in-vreg lane slices per gate.
        sig = jax.nn.sigmoid(gates)
        tnh = jnp.tanh(gates)
        i_g = sig[:, 0 * G:1 * G]
        f_g = sig[:, 1 * G:2 * G]
        g_g = tnh[:, 2 * G:3 * G]
        o_g = sig[:, 3 * G:4 * G]
        c = f_g * c + i_g * g_g
        h = o_g * jnp.tanh(c)
        # Fused L1 normalization over the batch axis (dim=1 of (T, B, G),
        # keepdim=True) — off the carry chain, hides under next step's MXU.
        l1 = jnp.sum(jnp.abs(h), axis=0, keepdims=True)             # (1, G)
        g_ref[t * B:(t + 1) * B, :] = (
            h * pl.reciprocal(l1, approx=True)).astype(g_ref.dtype)

    hn_ref[...] = h.astype(hn_ref.dtype)
    cn_ref[...] = c.astype(cn_ref.dtype)


def worker_base_forward(inputs, hidden, w_ih, w_hh, b_ih, b_hh):
    """Pallas implementation of WorkerBase / ManagerBase forward.

    inputs : (T, B, G) f32   (PyTorch nn.LSTM (T, N, C) convention)
    hidden : (h0, c0), each (1, B, G) f32
    weights: PyTorch-layout LSTM params: w_ih (4G, G), w_hh (4G, G),
             b_ih (4G,), b_hh (4G,)
    Returns (m_v=None, g, (h_n, c_n)) like the PyTorch module.
    """
    h0, c0 = hidden
    T, B, G = inputs.shape
    assert h0.shape == (1, B, G) and c0.shape == (1, B, G)

    x2d = jnp.asarray(inputs, jnp.float32).reshape(T * B, G)     # (T*B, G)
    h0_2d = jnp.asarray(h0, jnp.float32).reshape(B, G)
    c0_2d = jnp.asarray(c0, jnp.float32).reshape(B, G)
    wih_t = jnp.asarray(w_ih, jnp.float32).T                     # (G, 4G)
    whh_t = jnp.asarray(w_hh, jnp.float32).T                     # (G, 4G)
    bias = (jnp.asarray(b_ih, jnp.float32)
            + jnp.asarray(b_hh, jnp.float32)).reshape(1, 4 * G)

    vmem = pl.BlockSpec(memory_space=pltpu.MemorySpace.VMEM)

    g2d, hn2d, cn2d = pl.pallas_call(
        _worker_lstm_kernel,
        out_shape=(
            jax.ShapeDtypeStruct((T * B, G), jnp.float32),       # g (dense)
            jax.ShapeDtypeStruct((B, G), jnp.float32),           # h_n
            jax.ShapeDtypeStruct((B, G), jnp.float32),           # c_n
        ),
        in_specs=[vmem] * 6,
        out_specs=(vmem, vmem, vmem),
    )(x2d, h0_2d, c0_2d, wih_t, whh_t, bias)

    g = g2d.reshape(T, B, G)
    h_n = hn2d.reshape(1, B, G)
    c_n = cn2d.reshape(1, B, G)

    m_v = None  # WorkerBase never assigns m_v before returning it
    return m_v, g, (h_n, c_n)


def _reference_forward(inputs, hidden, w_ih, w_hh, b_ih, b_hh):
    """Pure-JAX reference (mirrors torch.nn.LSTM + L1 normalization)."""
    h0, c0 = hidden

    def step(carry, x_t):
        h, c = carry
        gates = x_t @ w_ih.T + b_ih + h @ w_hh.T + b_hh
        i, f, g, o = jnp.split(gates, 4, axis=-1)
        i, f, o = jax.nn.sigmoid(i), jax.nn.sigmoid(f), jax.nn.sigmoid(o)
        g = jnp.tanh(g)
        c = f * c + i * g
        h = o * jnp.tanh(c)
        return (h, c), h

    (h_n, c_n), g_hat = jax.lax.scan(step, (h0[0], c0[0]), inputs)
    g_norm = g_hat / jnp.sum(jnp.abs(g_hat), axis=1, keepdims=True)
    return g_norm, h_n[None], c_n[None]


if __name__ == "__main__":
    # Shapes consistent with the module: nn.LSTM(g_dim, g_dim), batch=1 hidden
    # from _init_hidden(), arbitrary (small) sequence length.
    T, B, G = 8, 1, 32

    key = jax.random.PRNGKey(0)
    k_x, k_wih, k_whh, k_bih, k_bhh = jax.random.split(key, 5)

    # PyTorch-style U(-1/sqrt(G), 1/sqrt(G)) LSTM init.
    bound = 1.0 / (G ** 0.5)
    w_ih = jax.random.uniform(k_wih, (4 * G, G), jnp.float32, -bound, bound)
    w_hh = jax.random.uniform(k_whh, (4 * G, G), jnp.float32, -bound, bound)
    b_ih = jax.random.uniform(k_bih, (4 * G,), jnp.float32, -bound, bound)
    b_hh = jax.random.uniform(k_bhh, (4 * G,), jnp.float32, -bound, bound)

    inputs = jax.random.normal(k_x, (T, B, G), jnp.float32)
    # _init_hidden(): zeros of shape (1, 1, g_dim).
    hidden = (jnp.zeros((1, B, G), jnp.float32),
              jnp.zeros((1, B, G), jnp.float32))
    # `states`/`masks` args of forward() are unused by the module body.

    m_v, g, (h_n, c_n) = worker_base_forward(inputs, hidden,
                                             w_ih, w_hh, b_ih, b_hh)
    jax.block_until_ready((g, h_n, c_n))

    g_ref, h_ref, c_ref = _reference_forward(inputs, hidden,
                                             w_ih, w_hh, b_ih, b_hh)
    # g uses the approximate EUP reciprocal (pl.reciprocal(approx=True)), so
    # compare with a slightly looser tolerance; h/c carries are exact f32.
    assert jnp.allclose(g, g_ref, atol=5e-3, rtol=5e-3)
    assert jnp.allclose(h_n, h_ref, atol=1e-5, rtol=1e-5)
    assert jnp.allclose(c_n, c_ref, atol=1e-5, rtol=1e-5)
    assert m_v is None

    print("KERNEL_OK")
</pallas_src>

<mosaic_0001>
module attributes {stable_mosaic.version = 11 : i64} {
  func.func @_worker_lstm_kernel(%arg0: memref<8x32xf32, #tpu.memory_space<vmem>>, %arg1: memref<1x32xf32, #tpu.memory_space<vmem>>, %arg2: memref<1x32xf32, #tpu.memory_space<vmem>>, %arg3: memref<32x128xf32, #tpu.memory_space<vmem>>, %arg4: memref<32x128xf32, #tpu.memory_space<vmem>>, %arg5: memref<1x128xf32, #tpu.memory_space<vmem>>, %arg6: memref<8x32xf32, #tpu.memory_space<vmem>>, %arg7: memref<1x32xf32, #tpu.memory_space<vmem>>, %arg8: memref<1x32xf32, #tpu.memory_space<vmem>>) attributes {dimension_semantics = [], scalar_prefetch = 0 : i64, scratch_operands = 0 : i64, tpu.core_type = #tpu.core_type<tc>} {
    %c0 = arith.constant 0 : index
    %c0_0 = arith.constant 0 : index
    %0 = vector.load %arg0[%c0, %c0_0] : memref<8x32xf32, #tpu.memory_space<vmem>>, vector<8x32xf32>
    %c0_1 = arith.constant 0 : index
    %c0_2 = arith.constant 0 : index
    %1 = vector.load %arg3[%c0_1, %c0_2] : memref<32x128xf32, #tpu.memory_space<vmem>>, vector<32x128xf32>
    %cst = arith.constant dense<0.000000e+00> : vector<8x128xf32>
    %2 = tpu.matmul %0, %1, %cst {dimension_numbers = #tpu.dot_dimension_numbers<[1], [0], [0], [1], [0, 0, 1, 1], [], []>} : vector<8x32xf32>, vector<32x128xf32>, vector<8x128xf32> -> vector<8x128xf32>
    %c0_3 = arith.constant 0 : index
    %c0_4 = arith.constant 0 : index
    %3 = vector.load %arg5[%c0_3, %c0_4] : memref<1x128xf32, #tpu.memory_space<vmem>>, vector<1x128xf32>
    %4 = vector.broadcast %3 : vector<1x128xf32> to vector<8x128xf32>
    %5 = arith.addf %2, %4 : vector<8x128xf32>
    %c0_5 = arith.constant 0 : index
    %c0_6 = arith.constant 0 : index
    %6 = vector.load %arg4[%c0_5, %c0_6] : memref<32x128xf32, #tpu.memory_space<vmem>>, vector<32x128xf32>
    %c0_7 = arith.constant 0 : index
    %c0_8 = arith.constant 0 : index
    %7 = vector.load %arg1[%c0_7, %c0_8] : memref<1x32xf32, #tpu.memory_space<vmem>>, vector<1x32xf32>
    %c0_9 = arith.constant 0 : index
    %c0_10 = arith.constant 0 : index
    %8 = vector.load %arg2[%c0_9, %c0_10] : memref<1x32xf32, #tpu.memory_space<vmem>>, vector<1x32xf32>
    %9 = vector.extract_strided_slice %5 {offsets = [0, 0], sizes = [1, 128], strides = [1, 1]} : vector<8x128xf32> to vector<1x128xf32>
    %cst_11 = arith.constant dense<0.000000e+00> : vector<1x128xf32>
    %10 = tpu.matmul %7, %6, %cst_11 {dimension_numbers = #tpu.dot_dimension_numbers<[1], [0], [0], [1], [0, 0, 1, 1], [], []>} : vector<1x32xf32>, vector<32x128xf32>, vector<1x128xf32> -> vector<1x128xf32>
    %11 = arith.addf %9, %10 : vector<1x128xf32>
    %12 = arith.negf %11 : vector<1x128xf32>
    %13 = math.exp %12 : vector<1x128xf32>
    %cst_12 = arith.constant 1.000000e+00 : f32
    %14 = vector.broadcast %cst_12 : f32 to vector<1x128xf32>
    %15 = arith.addf %14, %13 : vector<1x128xf32>
    %16 = arith.divf %14, %15 : vector<1x128xf32>
    %17 = math.tanh %11 : vector<1x128xf32>
    %18 = vector.extract_strided_slice %16 {offsets = [0, 0], sizes = [1, 32], strides = [1, 1]} : vector<1x128xf32> to vector<1x32xf32>
    %19 = vector.extract_strided_slice %16 {offsets = [0, 32], sizes = [1, 32], strides = [1, 1]} : vector<1x128xf32> to vector<1x32xf32>
    %20 = vector.extract_strided_slice %17 {offsets = [0, 64], sizes = [1, 32], strides = [1, 1]} : vector<1x128xf32> to vector<1x32xf32>
    %21 = vector.extract_strided_slice %16 {offsets = [0, 96], sizes = [1, 32], strides = [1, 1]} : vector<1x128xf32> to vector<1x32xf32>
    %22 = arith.mulf %19, %8 : vector<1x32xf32>
    %23 = arith.mulf %18, %20 : vector<1x32xf32>
    %24 = arith.addf %22, %23 : vector<1x32xf32>
    %25 = math.tanh %24 : vector<1x32xf32>
    %26 = arith.mulf %21, %25 : vector<1x32xf32>
    %27 = math.absf %26 : vector<1x32xf32>
    %cst_13 = arith.constant dense<0.000000e+00> : vector<32xf32>
    %28 = vector.multi_reduction <add>, %27, %cst_13 [0] : vector<1x32xf32> to vector<32xf32>
    %29 = vector.shape_cast %28 : vector<32xf32> to vector<1x32xf32>
    %30 = tpu.reciprocal %29 {approx = true} : vector<1x32xf32> -> vector<1x32xf32>
    %31 = arith.mulf %26, %30 : vector<1x32xf32>
    %c0_14 = arith.constant 0 : index
    %c0_15 = arith.constant 0 : index
    %32 = vector.load %arg6[%c0_14, %c0_15] : memref<8x32xf32, #tpu.memory_space<vmem>>, vector<1x32xf32>
    tpu.vector_store %arg6[%c0_14, %c0_15], %31 {strides = array<i32>} : memref<8x32xf32, #tpu.memory_space<vmem>>, vector<1x32xf32>,
    %33 = vector.extract_strided_slice %5 {offsets = [1, 0], sizes = [1, 128], strides = [1, 1]} : vector<8x128xf32> to vector<1x128xf32>
    %cst_16 = arith.constant dense<0.000000e+00> : vector<1x128xf32>
    %34 = tpu.matmul %26, %6, %cst_16 {dimension_numbers = #tpu.dot_dimension_numbers<[1], [0], [0], [1], [0, 0, 1, 1], [], []>} : vector<1x32xf32>, vector<32x128xf32>, vector<1x128xf32> -> vector<1x128xf32>
    %35 = arith.addf %33, %34 : vector<1x128xf32>
    %36 = arith.negf %35 : vector<1x128xf32>
    %37 = math.exp %36 : vector<1x128xf32>
    %cst_17 = arith.constant 1.000000e+00 : f32
    %38 = vector.broadcast %cst_17 : f32 to vector<1x128xf32>
    %39 = arith.addf %38, %37 : vector<1x128xf32>
    %40 = arith.divf %38, %39 : vector<1x128xf32>
    %41 = math.tanh %35 : vector<1x128xf32>
    %42 = vector.extract_strided_slice %40 {offsets = [0, 0], sizes = [1, 32], strides = [1, 1]} : vector<1x128xf32> to vector<1x32xf32>
    %43 = vector.extract_strided_slice %40 {offsets = [0, 32], sizes = [1, 32], strides = [1, 1]} : vector<1x128xf32> to vector<1x32xf32>
    %44 = vector.extract_strided_slice %41 {offsets = [0, 64], sizes = [1, 32], strides = [1, 1]} : vector<1x128xf32> to vector<1x32xf32>
    %45 = vector.extract_strided_slice %40 {offsets = [0, 96], sizes = [1, 32], strides = [1, 1]} : vector<1x128xf32> to vector<1x32xf32>
    %46 = arith.mulf %43, %24 : vector<1x32xf32>
    %47 = arith.mulf %42, %44 : vector<1x32xf32>
    %48 = arith.addf %46, %47 : vector<1x32xf32>
    %49 = math.tanh %48 : vector<1x32xf32>
    %50 = arith.mulf %45, %49 : vector<1x32xf32>
    %51 = math.absf %50 : vector<1x32xf32>
    %cst_18 = arith.constant dense<0.000000e+00> : vector<32xf32>
    %52 = vector.multi_reduction <add>, %51, %cst_18 [0] : vector<1x32xf32> to vector<32xf32>
    %53 = vector.shape_cast %52 : vector<32xf32> to vector<1x32xf32>
    %54 = tpu.reciprocal %53 {approx = true} : vector<1x32xf32> -> vector<1x32xf32>
    %55 = arith.mulf %50, %54 : vector<1x32xf32>
    %c1 = arith.constant 1 : index
    %c0_19 = arith.constant 0 : index
    %56 = vector.load %arg6[%c1, %c0_19] : memref<8x32xf32, #tpu.memory_space<vmem>>, vector<1x32xf32>
    tpu.vector_store %arg6[%c1, %c0_19], %55 {strides = array<i32>} : memref<8x32xf32, #tpu.memory_space<vmem>>, vector<1x32xf32>,
    %57 = vector.extract_strided_slice %5 {offsets = [2, 0], sizes = [1, 128], strides = [1, 1]} : vector<8x128xf32> to vector<1x128xf32>
    %cst_20 = arith.constant dense<0.000000e+00> : vector<1x128xf32>
    %58 = tpu.matmul %50, %6, %cst_20 {dimension_numbers = #tpu.dot_dimension_numbers<[1], [0], [0], [1], [0, 0, 1, 1], [], []>} : vector<1x32xf32>, vector<32x128xf32>, vector<1x128xf32> -> vector<1x128xf32>
    %59 = arith.addf %57, %58 : vector<1x128xf32>
    %60 = arith.negf %59 : vector<1x128xf32>
    %61 = math.exp %60 : vector<1x128xf32>
    %cst_21 = arith.constant 1.000000e+00 : f32
    %62 = vector.broadcast %cst_21 : f32 to vector<1x128xf32>
    %63 = arith.addf %62, %61 : vector<1x128xf32>
    %64 = arith.divf %62, %63 : vector<1x128xf32>
    %65 = math.tanh %59 : vector<1x128xf32>
    %66 = vector.extract_strided_slice %64 {offsets = [0, 0], sizes = [1, 32], strides = [1, 1]} : vector<1x128xf32> to vector<1x32xf32>
    %67 = vector.extract_strided_slice %64 {offsets = [0, 32], sizes = [1, 32], strides = [1, 1]} : vector<1x128xf32> to vector<1x32xf32>
    %68 = vector.extract_strided_slice %65 {offsets = [0, 64], sizes = [1, 32], strides = [1, 1]} : vector<1x128xf32> to vector<1x32xf32>
    %69 = vector.extract_strided_slice %64 {offsets = [0, 96], sizes = [1, 32], strides = [1, 1]} : vector<1x128xf32> to vector<1x32xf32>
    %70 = arith.mulf %67, %48 : vector<1x32xf32>
    %71 = arith.mulf %66, %68 : vector<1x32xf32>
    %72 = arith.addf %70, %71 : vector<1x32xf32>
    %73 = math.tanh %72 : vector<1x32xf32>
    %74 = arith.mulf %69, %73 : vector<1x32xf32>
    %75 = math.absf %74 : vector<1x32xf32>
    %cst_22 = arith.constant dense<0.000000e+00> : vector<32xf32>
    %76 = vector.multi_reduction <add>, %75, %cst_22 [0] : vector<1x32xf32> to vector<32xf32>
    %77 = vector.shape_cast %76 : vector<32xf32> to vector<1x32xf32>
    %78 = tpu.reciprocal %77 {approx = true} : vector<1x32xf32> -> vector<1x32xf32>
    %79 = arith.mulf %74, %78 : vector<1x32xf32>
    %c2 = arith.constant 2 : index
    %c0_23 = arith.constant 0 : index
    %80 = vector.load %arg6[%c2, %c0_23] : memref<8x32xf32, #tpu.memory_space<vmem>>, vector<1x32xf32>
    tpu.vector_store %arg6[%c2, %c0_23], %79 {strides = array<i32>} : memref<8x32xf32, #tpu.memory_space<vmem>>, vector<1x32xf32>,
    %81 = vector.extract_strided_slice %5 {offsets = [3, 0], sizes = [1, 128], strides = [1, 1]} : vector<8x128xf32> to vector<1x128xf32>
    %cst_24 = arith.constant dense<0.000000e+00> : vector<1x128xf32>
    %82 = tpu.matmul %74, %6, %cst_24 {dimension_numbers = #tpu.dot_dimension_numbers<[1], [0], [0], [1], [0, 0, 1, 1], [], []>} : vector<1x32xf32>, vector<32x128xf32>, vector<1x128xf32> -> vector<1x128xf32>
    %83 = arith.addf %81, %82 : vector<1x128xf32>
    %84 = arith.negf %83 : vector<1x128xf32>
    %85 = math.exp %84 : vector<1x128xf32>
    %cst_25 = arith.constant 1.000000e+00 : f32
    %86 = vector.broadcast %cst_25 : f32 to vector<1x128xf32>
    %87 = arith.addf %86, %85 : vector<1x128xf32>
    %88 = arith.divf %86, %87 : vector<1x128xf32>
    %89 = math.tanh %83 : vector<1x128xf32>
    %90 = vector.extract_strided_slice %88 {offsets = [0, 0], sizes = [1, 32], strides = [1, 1]} : vector<1x128xf32> to vector<1x32xf32>
    %91 = vector.extract_strided_slice %88 {offsets = [0, 32], sizes = [1, 32], strides = [1, 1]} : vector<1x128xf32> to vector<1x32xf32>
    %92 = vector.extract_strided_slice %89 {offsets = [0, 64], sizes = [1, 32], strides = [1, 1]} : vector<1x128xf32> to vector<1x32xf32>
    %93 = vector.extract_strided_slice %88 {offsets = [0, 96], sizes = [1, 32], strides = [1, 1]} : vector<1x128xf32> to vector<1x32xf32>
    %94 = arith.mulf %91, %72 : vector<1x32xf32>
    %95 = arith.mulf %90, %92 : vector<1x32xf32>
    %96 = arith.addf %94, %95 : vector<1x32xf32>
    %97 = math.tanh %96 : vector<1x32xf32>
    %98 = arith.mulf %93, %97 : vector<1x32xf32>
    %99 = math.absf %98 : vector<1x32xf32>
    %cst_26 = arith.constant dense<0.000000e+00> : vector<32xf32>
    %100 = vector.multi_reduction <add>, %99, %cst_26 [0] : vector<1x32xf32> to vector<32xf32>
    %101 = vector.shape_cast %100 : vector<32xf32> to vector<1x32xf32>
    %102 = tpu.reciprocal %101 {approx = true} : vector<1x32xf32> -> vector<1x32xf32>
    %103 = arith.mulf %98, %102 : vector<1x32xf32>
    %c3 = arith.constant 3 : index
    %c0_27 = arith.constant 0 : index
    %104 = vector.load %arg6[%c3, %c0_27] : memref<8x32xf32, #tpu.memory_space<vmem>>, vector<1x32xf32>
    tpu.vector_store %arg6[%c3, %c0_27], %103 {strides = array<i32>} : memref<8x32xf32, #tpu.memory_space<vmem>>, vector<1x32xf32>,
    %105 = vector.extract_strided_slice %5 {offsets = [4, 0], sizes = [1, 128], strides = [1, 1]} : vector<8x128xf32> to vector<1x128xf32>
    %cst_28 = arith.constant dense<0.000000e+00> : vector<1x128xf32>
    %106 = tpu.matmul %98, %6, %cst_28 {dimension_numbers = #tpu.dot_dimension_numbers<[1], [0], [0], [1], [0, 0, 1, 1], [], []>} : vector<1x32xf32>, vector<32x128xf32>, vector<1x128xf32> -> vector<1x128xf32>
    %107 = arith.addf %105, %106 : vector<1x128xf32>
    %108 = arith.negf %107 : vector<1x128xf32>
    %109 = math.exp %108 : vector<1x128xf32>
    %cst_29 = arith.constant 1.000000e+00 : f32
    %110 = vector.broadcast %cst_29 : f32 to vector<1x128xf32>
    %111 = arith.addf %110, %109 : vector<1x128xf32>
    %112 = arith.divf %110, %111 : vector<1x128xf32>
    %113 = math.tanh %107 : vector<1x128xf32>
    %114 = vector.extract_strided_slice %112 {offsets = [0, 0], sizes = [1, 32], strides = [1, 1]} : vector<1x128xf32> to vector<1x32xf32>
    %115 = vector.extract_strided_slice %112 {offsets = [0, 32], sizes = [1, 32], strides = [1, 1]} : vector<1x128xf32> to vector<1x32xf32>
    %116 = vector.extract_strided_slice %113 {offsets = [0, 64], sizes = [1, 32], strides = [1, 1]} : vector<1x128xf32> to vector<1x32xf32>
    %117 = vector.extract_strided_slice %112 {offsets = [0, 96], sizes = [1, 32], strides = [1, 1]} : vector<1x128xf32> to vector<1x32xf32>
    %118 = arith.mulf %115, %96 : vector<1x32xf32>
    %119 = arith.mulf %114, %116 : vector<1x32xf32>
    %120 = arith.addf %118, %119 : vector<1x32xf32>
    %121 = math.tanh %120 : vector<1x32xf32>
    %122 = arith.mulf %117, %121 : vector<1x32xf32>
    %123 = math.absf %122 : vector<1x32xf32>
    %cst_30 = arith.constant dense<0.000000e+00> : vector<32xf32>
    %124 = vector.multi_reduction <add>, %123, %cst_30 [0] : vector<1x32xf32> to vector<32xf32>
    %125 = vector.shape_cast %124 : vector<32xf32> to vector<1x32xf32>
    %126 = tpu.reciprocal %125 {approx = true} : vector<1x32xf32> -> vector<1x32xf32>
    %127 = arith.mulf %122, %126 : vector<1x32xf32>
    %c4 = arith.constant 4 : index
    %c0_31 = arith.constant 0 : index
    %128 = vector.load %arg6[%c4, %c0_31] : memref<8x32xf32, #tpu.memory_space<vmem>>, vector<1x32xf32>
    tpu.vector_store %arg6[%c4, %c0_31], %127 {strides = array<i32>} : memref<8x32xf32, #tpu.memory_space<vmem>>, vector<1x32xf32>,
    %129 = vector.extract_strided_slice %5 {offsets = [5, 0], sizes = [1, 128], strides = [1, 1]} : vector<8x128xf32> to vector<1x128xf32>
    %cst_32 = arith.constant dense<0.000000e+00> : vector<1x128xf32>
    %130 = tpu.matmul %122, %6, %cst_32 {dimension_numbers = #tpu.dot_dimension_numbers<[1], [0], [0], [1], [0, 0, 1, 1], [], []>} : vector<1x32xf32>, vector<32x128xf32>, vector<1x128xf32> -> vector<1x128xf32>
    %131 = arith.addf %129, %130 : vector<1x128xf32>
    %132 = arith.negf %131 : vector<1x128xf32>
    %133 = math.exp %132 : vector<1x128xf32>
    %cst_33 = arith.constant 1.000000e+00 : f32
    %134 = vector.broadcast %cst_33 : f32 to vector<1x128xf32>
    %135 = arith.addf %134, %133 : vector<1x128xf32>
    %136 = arith.divf %134, %135 : vector<1x128xf32>
    %137 = math.tanh %131 : vector<1x128xf32>
    %138 = vector.extract_strided_slice %136 {offsets = [0, 0], sizes = [1, 32], strides = [1, 1]} : vector<1x128xf32> to vector<1x32xf32>
    %139 = vector.extract_strided_slice %136 {offsets = [0, 32], sizes = [1, 32], strides = [1, 1]} : vector<1x128xf32> to vector<1x32xf32>
    %140 = vector.extract_strided_slice %137 {offsets = [0, 64], sizes = [1, 32], strides = [1, 1]} : vector<1x128xf32> to vector<1x32xf32>
    %141 = vector.extract_strided_slice %136 {offsets = [0, 96], sizes = [1, 32], strides = [1, 1]} : vector<1x128xf32> to vector<1x32xf32>
    %142 = arith.mulf %139, %120 : vector<1x32xf32>
    %143 = arith.mulf %138, %140 : vector<1x32xf32>
    %144 = arith.addf %142, %143 : vector<1x32xf32>
    %145 = math.tanh %144 : vector<1x32xf32>
    %146 = arith.mulf %141, %145 : vector<1x32xf32>
    %147 = math.absf %146 : vector<1x32xf32>
    %cst_34 = arith.constant dense<0.000000e+00> : vector<32xf32>
    %148 = vector.multi_reduction <add>, %147, %cst_34 [0] : vector<1x32xf32> to vector<32xf32>
    %149 = vector.shape_cast %148 : vector<32xf32> to vector<1x32xf32>
    %150 = tpu.reciprocal %149 {approx = true} : vector<1x32xf32> -> vector<1x32xf32>
    %151 = arith.mulf %146, %150 : vector<1x32xf32>
    %c5 = arith.constant 5 : index
    %c0_35 = arith.constant 0 : index
    %152 = vector.load %arg6[%c5, %c0_35] : memref<8x32xf32, #tpu.memory_space<vmem>>, vector<1x32xf32>
    tpu.vector_store %arg6[%c5, %c0_35], %151 {strides = array<i32>} : memref<8x32xf32, #tpu.memory_space<vmem>>, vector<1x32xf32>,
    %153 = vector.extract_strided_slice %5 {offsets = [6, 0], sizes = [1, 128], strides = [1, 1]} : vector<8x128xf32> to vector<1x128xf32>
    %cst_36 = arith.constant dense<0.000000e+00> : vector<1x128xf32>
    %154 = tpu.matmul %146, %6, %cst_36 {dimension_numbers = #tpu.dot_dimension_numbers<[1], [0], [0], [1], [0, 0, 1, 1], [], []>} : vector<1x32xf32>, vector<32x128xf32>, vector<1x128xf32> -> vector<1x128xf32>
    %155 = arith.addf %153, %154 : vector<1x128xf32>
    %156 = arith.negf %155 : vector<1x128xf32>
    %157 = math.exp %156 : vector<1x128xf32>
    %cst_37 = arith.constant 1.000000e+00 : f32
    %158 = vector.broadcast %cst_37 : f32 to vector<1x128xf32>
    %159 = arith.addf %158, %157 : vector<1x128xf32>
    %160 = arith.divf %158, %159 : vector<1x128xf32>
    %161 = math.tanh %155 : vector<1x128xf32>
    %162 = vector.extract_strided_slice %160 {offsets = [0, 0], sizes = [1, 32], strides = [1, 1]} : vector<1x128xf32> to vector<1x32xf32>
    %163 = vector.extract_strided_slice %160 {offsets = [0, 32], sizes = [1, 32], strides = [1, 1]} : vector<1x128xf32> to vector<1x32xf32>
    %164 = vector.extract_strided_slice %161 {offsets = [0, 64], sizes = [1, 32], strides = [1, 1]} : vector<1x128xf32> to vector<1x32xf32>
    %165 = vector.extract_strided_slice %160 {offsets = [0, 96], sizes = [1, 32], strides = [1, 1]} : vector<1x128xf32> to vector<1x32xf32>
    %166 = arith.mulf %163, %144 : vector<1x32xf32>
    %167 = arith.mulf %162, %164 : vector<1x32xf32>
    %168 = arith.addf %166, %167 : vector<1x32xf32>
    %169 = math.tanh %168 : vector<1x32xf32>
    %170 = arith.mulf %165, %169 : vector<1x32xf32>
    %171 = math.absf %170 : vector<1x32xf32>
    %cst_38 = arith.constant dense<0.000000e+00> : vector<32xf32>
    %172 = vector.multi_reduction <add>, %171, %cst_38 [0] : vector<1x32xf32> to vector<32xf32>
    %173 = vector.shape_cast %172 : vector<32xf32> to vector<1x32xf32>
    %174 = tpu.reciprocal %173 {approx = true} : vector<1x32xf32> -> vector<1x32xf32>
    %175 = arith.mulf %170, %174 : vector<1x32xf32>
    %c6 = arith.constant 6 : index
    %c0_39 = arith.constant 0 : index
    %176 = vector.load %arg6[%c6, %c0_39] : memref<8x32xf32, #tpu.memory_space<vmem>>, vector<1x32xf32>
    tpu.vector_store %arg6[%c6, %c0_39], %175 {strides = array<i32>} : memref<8x32xf32, #tpu.memory_space<vmem>>, vector<1x32xf32>,
    %177 = vector.extract_strided_slice %5 {offsets = [7, 0], sizes = [1, 128], strides = [1, 1]} : vector<8x128xf32> to vector<1x128xf32>
    %cst_40 = arith.constant dense<0.000000e+00> : vector<1x128xf32>
    %178 = tpu.matmul %170, %6, %cst_40 {dimension_numbers = #tpu.dot_dimension_numbers<[1], [0], [0], [1], [0, 0, 1, 1], [], []>} : vector<1x32xf32>, vector<32x128xf32>, vector<1x128xf32> -> vector<1x128xf32>
    %179 = arith.addf %177, %178 : vector<1x128xf32>
    %180 = arith.negf %179 : vector<1x128xf32>
    %181 = math.exp %180 : vector<1x128xf32>
    %cst_41 = arith.constant 1.000000e+00 : f32
    %182 = vector.broadcast %cst_41 : f32 to vector<1x128xf32>
    %183 = arith.addf %182, %181 : vector<1x128xf32>
    %184 = arith.divf %182, %183 : vector<1x128xf32>
    %185 = math.tanh %179 : vector<1x128xf32>
    %186 = vector.extract_strided_slice %184 {offsets = [0, 0], sizes = [1, 32], strides = [1, 1]} : vector<1x128xf32> to vector<1x32xf32>
    %187 = vector.extract_strided_slice %184 {offsets = [0, 32], sizes = [1, 32], strides = [1, 1]} : vector<1x128xf32> to vector<1x32xf32>
    %188 = vector.extract_strided_slice %185 {offsets = [0, 64], sizes = [1, 32], strides = [1, 1]} : vector<1x128xf32> to vector<1x32xf32>
    %189 = vector.extract_strided_slice %184 {offsets = [0, 96], sizes = [1, 32], strides = [1, 1]} : vector<1x128xf32> to vector<1x32xf32>
    %190 = arith.mulf %187, %168 : vector<1x32xf32>
    %191 = arith.mulf %186, %188 : vector<1x32xf32>
    %192 = arith.addf %190, %191 : vector<1x32xf32>
    %193 = math.tanh %192 : vector<1x32xf32>
    %194 = arith.mulf %189, %193 : vector<1x32xf32>
    %195 = math.absf %194 : vector<1x32xf32>
    %cst_42 = arith.constant dense<0.000000e+00> : vector<32xf32>
    %196 = vector.multi_reduction <add>, %195, %cst_42 [0] : vector<1x32xf32> to vector<32xf32>
    %197 = vector.shape_cast %196 : vector<32xf32> to vector<1x32xf32>
    %198 = tpu.reciprocal %197 {approx = true} : vector<1x32xf32> -> vector<1x32xf32>
    %199 = arith.mulf %194, %198 : vector<1x32xf32>
    %c7 = arith.constant 7 : index
    %c0_43 = arith.constant 0 : index
    %200 = vector.load %arg6[%c7, %c0_43] : memref<8x32xf32, #tpu.memory_space<vmem>>, vector<1x32xf32>
    tpu.vector_store %arg6[%c7, %c0_43], %199 {strides = array<i32>} : memref<8x32xf32, #tpu.memory_space<vmem>>, vector<1x32xf32>,
    %c0_44 = arith.constant 0 : index
    %c0_45 = arith.constant 0 : index
    %201 = vector.load %arg7[%c0_44, %c0_45] : memref<1x32xf32, #tpu.memory_space<vmem>>, vector<1x32xf32>
    tpu.vector_store %arg7[%c0_44, %c0_45], %194 {strides = array<i32>} : memref<1x32xf32, #tpu.memory_space<vmem>>, vector<1x32xf32>,
    %c0_46 = arith.constant 0 : index
    %c0_47 = arith.constant 0 : index
    %202 = vector.load %arg8[%c0_46, %c0_47] : memref<1x32xf32, #tpu.memory_space<vmem>>, vector<1x32xf32>
    tpu.vector_store %arg8[%c0_46, %c0_47], %192 {strides = array<i32>} : memref<1x32xf32, #tpu.memory_space<vmem>>, vector<1x32xf32>,
    return
  }
}

</mosaic_0001>

<llo_original>
// kernel: tpu_custom_call.1
$region0: #{tpu_custom_call.1}
  #allocation0 [shape = 'u32[]', space=smem, size = 0x4, offset = 0x4, fixed_abs, tag = 'smem constant byte address 0x4 - core index']
  #allocation1 [shape = 'u32[144,128]{1,0:T(1,128)}', space=vmem, size = 0x12000, scoped, tag = 'internal scratch']
  %s0 = inlined_call_operand.hbm [shape: f32[8,32], index: 0, kind: input, shape index: {}]
  %s1 = inlined_call_operand.vmem [shape: f32[1,32], index: 1, kind: input, shape index: {}]
  %s2 = inlined_call_operand.vmem [shape: f32[1,32], index: 2, kind: input, shape index: {}]
  %s3 = inlined_call_operand.hbm [shape: f32[32,128], index: 3, kind: input, shape index: {}]
  %s4 = inlined_call_operand.hbm [shape: f32[32,128], index: 4, kind: input, shape index: {}]
  %s5 = inlined_call_operand.vmem [shape: f32[1,128], index: 5, kind: input, shape index: {}]
  %s6 = inlined_call_operand.hbm [shape: f32[8,32], index: 6, kind: output, shape index: {0}]
  %s7 = inlined_call_operand.hbm [shape: f32[1,32], index: 7, kind: output, shape index: {1}]
  %s8 = inlined_call_operand.hbm [shape: f32[1,32], index: 8, kind: output, shape index: {2}]
  %9 = xla_tuple %s6, %s7, %s8
  %s10 = sld [smem:[#allocation0]]
  $region62: #{tpu_custom_call.1} parent=0
    _
  %s12 = ssub.s32 1, %s10
  %s13 = scalar_select 0, %s12, %s10
  $region1: #{tpu_custom_call.1} parent=0
    #allocation2 [shape = 'u8[4096]{0}', space=vmem, size = 0x1000, scoped, tag = 'input window, operand 0, single buffered']
    #allocation3 [shape = 's32[1]{0}', space=sflag, size = 0x4, scoped, tag = 'scoped memory for tpu_custom_call.1']
    #allocation4 [shape = 's32[1]{0}', space=sflag, size = 0x4, scoped, tag = 'scoped memory for tpu_custom_call.1']
    #allocation5 [shape = 'u8[16384]{0}', space=vmem, size = 0x4000, scoped, tag = 'input window, operand 3, single buffered']
    #allocation6 [shape = 's32[1]{0}', space=sflag, size = 0x4, scoped, tag = 'scoped memory for tpu_custom_call.1']
    #allocation7 [shape = 'u8[16384]{0}', space=vmem, size = 0x4000, scoped, tag = 'input window, operand 4, single buffered']
    #allocation8 [shape = 'u8[4096]{0}', space=vmem, size = 0x1000, scoped, tag = 'output window, operand 0, single buffered']
    #allocation9 [shape = 'u8[512]{0}', space=vmem, size = 0x400, scoped, tag = 'output window, operand 1, single buffered']
    #allocation10 [shape = 's32[1]{0}', space=sflag, size = 0x4, scoped, tag = 'scoped memory for tpu_custom_call.1']
    #allocation11 [shape = 'u8[512]{0}', space=vmem, size = 0x400, scoped, tag = 'output window, operand 2, single buffered']
    %14 = vsyncpa [#allocation3], 0
    %15 = vsyncpa [#allocation6], 0
    %16 = vsyncpa [#allocation4], 0
    %17 = vsyncpa [#allocation10], 0
    // Predicated region
    $region2: #{tpu_custom_call.1} parent=1 // pred_check
      _
    $region3: #{tpu_custom_call.1} parent=1 // pred_check_branch
      %19 = sbr.rel (0) target = $region5
    $region4: #{tpu_custom_call.1} parent=1 // pred_region
      %s21 = ssub.s32 128, 128
      %22 = vsyncadd [#allocation3], %s21
      %s24 = sshll.u32 [#allocation2], 4
      %s25 = int_to_ptr.vmem [resolvable:$true] %s24
      %27 = dma.hbm_to_vmem [thread:$0]  %s0, 128, %s25, [#allocation3]
    $region5: #{tpu_custom_call.1} parent=1 // pred_fallthru
      _
    // Predicated region
    $region6: #{tpu_custom_call.1} parent=1 // pred_check
      _
    $region7: #{tpu_custom_call.1} parent=1 // pred_check_branch
      %29 = sbr.rel (0) target = $region9
    $region8: #{tpu_custom_call.1} parent=1 // pred_region
      _
    $region9: #{tpu_custom_call.1} parent=1 // pred_fallthru
      _
    // Predicated region
    $region10: #{tpu_custom_call.1} parent=1 // pred_check
      _
    $region11: #{tpu_custom_call.1} parent=1 // pred_check_branch
      %31 = sbr.rel (0) target = $region13
    $region12: #{tpu_custom_call.1} parent=1 // pred_region
      _
    $region13: #{tpu_custom_call.1} parent=1 // pred_fallthru
      _
    // Predicated region
    $region14: #{tpu_custom_call.1} parent=1 // pred_check
      _
    $region15: #{tpu_custom_call.1} parent=1 // pred_check_branch
      %33 = sbr.rel (0) target = $region17
    $region16: #{tpu_custom_call.1} parent=1 // pred_region
      %s35 = ssub.s32 512, 512
      %36 = vsyncadd [#allocation6], %s35
      %s37 = sshll.u32 [#allocation5], 4
      %s38 = int_to_ptr.vmem [resolvable:$true] %s37
      %43 = dma.hbm_to_vmem [thread:$0]  %s3, 512, %s38, [#allocation6], 128, 128, 8
    $region17: #{tpu_custom_call.1} parent=1 // pred_fallthru
      _
    // Predicated region
    $region18: #{tpu_custom_call.1} parent=1 // pred_check
      _
    $region19: #{tpu_custom_call.1} parent=1 // pred_check_branch
      %45 = sbr.rel (0) target = $region21
    $region20: #{tpu_custom_call.1} parent=1 // pred_region
      %s47 = ssub.s32 512, 512
      %48 = vsyncadd [#allocation6], %s47
      %s49 = sshll.u32 [#allocation7], 4
      %s50 = int_to_ptr.vmem [resolvable:$true] %s49
      %55 = dma.hbm_to_vmem [thread:$0]  %s4, 512, %s50, [#allocation6], 128, 128, 8
    $region21: #{tpu_custom_call.1} parent=1 // pred_fallthru
      _
    // Predicated region
    $region22: #{tpu_custom_call.1} parent=1 // pred_check
      _
    $region23: #{tpu_custom_call.1} parent=1 // pred_check_branch
      %57 = sbr.rel (0) target = $region25
    $region24: #{tpu_custom_call.1} parent=1 // pred_region
      _
    $region25: #{tpu_custom_call.1} parent=1 // pred_fallthru
      _
    // Predicated region
    $region26: #{tpu_custom_call.1} parent=1 // pred_check
      _
    $region27: #{tpu_custom_call.1} parent=1 // pred_check_branch
      %59 = sbr.rel (0) target = $region29
    $region28: #{tpu_custom_call.1} parent=1 // pred_region
      %60 = dma.done [#allocation3], 128
    $region29: #{tpu_custom_call.1} parent=1 // pred_fallthru
      _
    // Predicated region
    $region30: #{tpu_custom_call.1} parent=1 // pred_check
      _
    $region31: #{tpu_custom_call.1} parent=1 // pred_check_branch
      %62 = sbr.rel (0) target = $region33
    $region32: #{tpu_custom_call.1} parent=1 // pred_region
      %63 = dma.done [#allocation6], 512
    $region33: #{tpu_custom_call.1} parent=1 // pred_fallthru
      _
    // Predicated region
    $region34: #{tpu_custom_call.1} parent=1 // pred_check
      _
    $region35: #{tpu_custom_call.1} parent=1 // pred_check_branch
      %65 = sbr.rel (0) target = $region37
    $region36: #{tpu_custom_call.1} parent=1 // pred_region
      %66 = dma.done [#allocation6], 512
    $region37: #{tpu_custom_call.1} parent=1 // pred_fallthru
      _
    %v67 = vld [vmem:[#allocation2] sm:$0xff]
    %v68 = vld [vmem:[#allocation5] sm:$0xff]
    %v69 = vld [vmem:[#allocation5 + $0x8] sm:$0xff]
    %v70 = vld [vmem:[#allocation5 + $0x10] sm:$0xff]
    %v71 = vld [vmem:[#allocation5 + $0x18] sm:$0xff]
    %v72 = vld [vmem:[%s5] sm:$0x1]
    %v74 = vlaneseq
    %v75 = vshrl.u32 %v74, 7
    %v76 = vsub.s32 0, %v75
    %v77 = vrot.slane %v72, %v76
    %vm79 = vcmask 261120
    %v81 = vsel %vm79, %v67, 0
    %83 = vmatprep.subr.mxu0 0.0
    %84 = vmatpush1.msra.mxu0 %v68
    %85 = vmatprep.subr.mxu0 0.0
    %86 = vmatpush1.msra.mxu0 %v69
    %87 = vmatprep.subr.mxu0 0.0
    %88 = vmatpush1.msra.mxu0 %v70
    %89 = vmatprep.subr.mxu0 0.0
    %90 = vmatpush1.msra.mxu0 %v71
    %91 = vmatprep.subr.mxu0 0.0
    %92 = vmatpush1.msra.mxu0 0.0
    %93 = vmatprep.subr.mxu0 0.0
    %94 = vmatpush1.msra.mxu0 0.0
    %95 = vmatprep.subr.mxu0 0.0
    %96 = vmatpush1.msra.mxu0 0.0
    %97 = vmatprep.subr.mxu0 0.0
    %98 = vmatpush1.msra.mxu0 0.0
    %99 = vmatprep.subr.mxu0 0.0
    %100 = vmatpush1.msra.mxu0 0.0
    %101 = vmatprep.subr.mxu0 0.0
    %102 = vmatpush1.msra.mxu0 0.0
    %103 = vmatprep.subr.mxu0 0.0
    %104 = vmatpush1.msra.mxu0 0.0
    %105 = vmatprep.subr.mxu0 0.0
    %106 = vmatpush1.msra.mxu0 0.0
    %107 = vmatprep.subr.mxu0 0.0
    %108 = vmatpush1.msra.mxu0 0.0
    %109 = vmatprep.subr.mxu0 0.0
    %110 = vmatpush1.msra.mxu0 0.0
    %111 = vmatprep.subr.mxu0 0.0
    %112 = vmatpush1.msra.mxu0 0.0
    %113 = vmatprep.subr.mxu0 0.0
    %114 = vmatpush1.msra.mxu0 0.0
    %115 = vmatprep.subr.mxu0 0.0
    %116 = vmatpush1.msra.mxu0 0.0
    %117 = vmatprep.subr.mxu0 0.0
    %118 = vmatpush1.msra.mxu0 0.0
    %119 = vmatprep.subr.mxu0 0.0
    %120 = vmatpush1.msra.mxu0 0.0
    %121 = vmatprep.subr.mxu0 0.0
    %122 = vmatpush1.msra.mxu0 0.0
    %123 = vmatprep.subr.mxu0 0.0
    %124 = vmatpush1.msra.mxu0 0.0
    %125 = vmatprep.subr.mxu0 0.0
    %126 = vmatpush1.msra.mxu0 0.0
    %127 = vmatprep.subr.mxu0 0.0
    %128 = vmatpush1.msra.mxu0 0.0
    %129 = vmatprep.subr.mxu0 0.0
    %130 = vmatpush1.msra.mxu0 0.0
    %131 = vmatprep.subr.mxu0 0.0
    %132 = vmatpush1.msra.mxu0 0.0
    %133 = vmatprep.subr.mxu0 0.0
    %134 = vmatpush1.msra.mxu0 0.0
    %135 = vmatprep.subr.mxu0 0.0
    %136 = vmatpush1.msra.mxu0 0.0
    %137 = vmatprep.subr.mxu0 0.0
    %138 = vmatpush1.msra.mxu0 0.0
    %139 = vmatprep.subr.mxu0 0.0
    %140 = vmatpush1.msra.mxu0 0.0
    %141 = vmatprep.subr.mxu0 0.0
    %142 = vmatpush1.msra.mxu0 0.0
    %143 = vmatprep.subr.mxu0 0.0
    %144 = vmatpush1.msra.mxu0 0.0
    %145 = vmatprep.subr.mxu0 0.0
    %146 = vmatpush1.msra.mxu0 0.0
    %147 = vmatprep.mubr.f32.mxu0 0.0
    %148 = vmatmul.mubr.f32.gmra.mrb[0].mxu0 %v81
    %v149 = vpop.f32.mrb[0].mxu0
    %v150 = vadd.f32 %v77, %v149
    %v151 = vpop.f32.mrb[0].mxu0
    %152 = vdwg.mxu0
    %v153 = vld [vmem:[#allocation7] sm:$0xff]
    %v154 = vld [vmem:[#allocation7 + $0x8] sm:$0xff]
    %v155 = vld [vmem:[#allocation7 + $0x10] sm:$0xff]
    %v156 = vld [vmem:[#allocation7 + $0x18] sm:$0xff]
    %v157 = vld [vmem:[%s1] sm:$0x1]
    %v158 = vld [vmem:[%s2] sm:$0x1]
    %v160 = vsel %vm79, %v157, 0
    %162 = vmatprep.subr.mxu0 0.0
    %163 = vmatpush1.msra.mxu0 %v153
    %164 = vmatprep.subr.mxu0 0.0
    %165 = vmatpush1.msra.mxu0 %v154
    %166 = vmatprep.subr.mxu0 0.0
    %167 = vmatpush1.msra.mxu0 %v155
    %168 = vmatprep.subr.mxu0 0.0
    %169 = vmatpush1.msra.mxu0 %v156
    %170 = vmatprep.subr.mxu0 0.0
    %171 = vmatpush1.msra.mxu0 0.0
    %172 = vmatprep.subr.mxu0 0.0
    %173 = vmatpush1.msra.mxu0 0.0
    %174 = vmatprep.subr.mxu0 0.0
    %175 = vmatpush1.msra.mxu0 0.0
    %176 = vmatprep.subr.mxu0 0.0
    %177 = vmatpush1.msra.mxu0 0.0
    %178 = vmatprep.subr.mxu0 0.0
    %179 = vmatpush1.msra.mxu0 0.0
    %180 = vmatprep.subr.mxu0 0.0
    %181 = vmatpush1.msra.mxu0 0.0
    %182 = vmatprep.subr.mxu0 0.0
    %183 = vmatpush1.msra.mxu0 0.0
    %184 = vmatprep.subr.mxu0 0.0
    %185 = vmatpush1.msra.mxu0 0.0
    %186 = vmatprep.subr.mxu0 0.0
    %187 = vmatpush1.msra.mxu0 0.0
    %188 = vmatprep.subr.mxu0 0.0
    %189 = vmatpush1.msra.mxu0 0.0
    %190 = vmatprep.subr.mxu0 0.0
    %191 = vmatpush1.msra.mxu0 0.0
    %192 = vmatprep.subr.mxu0 0.0
    %193 = vmatpush1.msra.mxu0 0.0
    %194 = vmatprep.subr.mxu0 0.0
    %195 = vmatpush1.msra.mxu0 0.0
    %196 = vmatprep.subr.mxu0 0.0
    %197 = vmatpush1.msra.mxu0 0.0
    %198 = vmatprep.subr.mxu0 0.0
    %199 = vmatpush1.msra.mxu0 0.0
    %200 = vmatprep.subr.mxu0 0.0
    %201 = vmatpush1.msra.mxu0 0.0
    %202 = vmatprep.subr.mxu0 0.0
    %203 = vmatpush1.msra.mxu0 0.0
    %204 = vmatprep.subr.mxu0 0.0
    %205 = vmatpush1.msra.mxu0 0.0
    %206 = vmatprep.subr.mxu0 0.0
    %207 = vmatpush1.msra.mxu0 0.0
    %208 = vmatprep.subr.mxu0 0.0
    %209 = vmatpush1.msra.mxu0 0.0
    %210 = vmatprep.subr.mxu0 0.0
    %211 = vmatpush1.msra.mxu0 0.0
    %212 = vmatprep.subr.mxu0 0.0
    %213 = vmatpush1.msra.mxu0 0.0
    %214 = vmatprep.subr.mxu0 0.0
    %215 = vmatpush1.msra.mxu0 0.0
    %216 = vmatprep.subr.mxu0 0.0
    %217 = vmatpush1.msra.mxu0 0.0
    %218 = vmatprep.subr.mxu0 0.0
    %219 = vmatpush1.msra.mxu0 0.0
    %220 = vmatprep.subr.mxu0 0.0
    %221 = vmatpush1.msra.mxu0 0.0
    %222 = vmatprep.subr.mxu0 0.0
    %223 = vmatpush1.msra.mxu0 0.0
    %224 = vmatprep.subr.mxu0 0.0
    %225 = vmatpush1.msra.mxu0 0.0
    %226 = vmatprep.mubr.f32.mxu0 0.0
    %227 = vmatmul.mubr.f32.gmra.mrb[0].mxu0 %v160
    %v228 = vpop.f32.mrb[0].mxu0
    %v229 = vadd.f32 0.0, %v228
    %v230 = vpop.f32.mrb[0].mxu0
    %231 = vdwg.mxu0
    %v232 = vadd.f32 %v150, %v229
    %v233 = vxor.u32 %v232, 2147483648
    %v234 = vmul.f32 %v233, 1.442695
    %v235 = vpow.pop %v234
    %v236 = vadd.f32 %v235, 1.0
    %v237 = vrcp.pop %v236
    %v238 = vmul.f32 1.0, %v237
    %v239 = vtanh.pop %v232
    %v241 = vlaneseq
    %v242 = vshrl.u32 %v241, 7
    %v243 = vsub.s32 0, %v242
    %v244 = vrot.slane %v158, %v243
    %245 = vrot.lane.b32.xlu0 %v244, 32
    %v246 = vpop.permute.xlu0 %245
    %v248 = vmul.f32 %v238, %v246
    %250 = vrot.lane.b32.xlu0 %v239, 64
    %v251 = vpop.permute.xlu0 %250
    %v253 = vmul.f32 %v238, %v251
    %255 = vrot.lane.b32.xlu0 %v253, 32
    %v256 = vpop.permute.xlu0 %255
    %v258 = vadd.f32 %v248, %v256
    %v259 = vtanh.pop %v258
    %261 = vrot.lane.b32.xlu0 %v259, 64
    %v262 = vpop.permute.xlu0 %261
    %v264 = vmul.f32 %v238, %v262
    %v265 = vand.u32 2147483647, %v264
    %v266 = vadd.f32 %v265, 0.0
    %v267 = vrcp.pop %v266
    %v268 = vmul.f32 %v264, %v267
    %270 = vrot.lane.b32.xlu0 %v268, 32
    %v271 = vpop.permute.xlu0 %270
    %vm273 = vcmask 253952
    %274 = vst.msk [vmem:[#allocation8] sm:$0x1] %vm273, %v271
    %276 = vrot.lane.b32.xlu0 %v264, 32
    %v277 = vpop.permute.xlu0 %276
    %v278 = vsel %vm79, %v277, 0
    %280 = vmatprep.subr.mxu0 0.0
    %281 = vmatpush1.msra.mxu0 %v153
    %282 = vmatprep.subr.mxu0 0.0
    %283 = vmatpush1.msra.mxu0 %v154
    %284 = vmatprep.subr.mxu0 0.0
    %285 = vmatpush1.msra.mxu0 %v155
    %286 = vmatprep.subr.mxu0 0.0
    %287 = vmatpush1.msra.mxu0 %v156
    %288 = vmatprep.subr.mxu0 0.0
    %289 = vmatpush1.msra.mxu0 0.0
    %290 = vmatprep.subr.mxu0 0.0
    %291 = vmatpush1.msra.mxu0 0.0
    %292 = vmatprep.subr.mxu0 0.0
    %293 = vmatpush1.msra.mxu0 0.0
    %294 = vmatprep.subr.mxu0 0.0
    %295 = vmatpush1.msra.mxu0 0.0
    %296 = vmatprep.subr.mxu0 0.0
    %297 = vmatpush1.msra.mxu0 0.0
    %298 = vmatprep.subr.mxu0 0.0
    %299 = vmatpush1.msra.mxu0 0.0
    %300 = vmatprep.subr.mxu0 0.0
    %301 = vmatpush1.msra.mxu0 0.0
    %302 = vmatprep.subr.mxu0 0.0
    %303 = vmatpush1.msra.mxu0 0.0
    %304 = vmatprep.subr.mxu0 0.0
    %305 = vmatpush1.msra.mxu0 0.0
    %306 = vmatprep.subr.mxu0 0.0
    %307 = vmatpush1.msra.mxu0 0.0
    %308 = vmatprep.subr.mxu0 0.0
    %309 = vmatpush1.msra.mxu0 0.0
    %310 = vmatprep.subr.mxu0 0.0
    %311 = vmatpush1.msra.mxu0 0.0
    %312 = vmatprep.subr.mxu0 0.0
    %313 = vmatpush1.msra.mxu0 0.0
    %314 = vmatprep.subr.mxu0 0.0
    %315 = vmatpush1.msra.mxu0 0.0
    %316 = vmatprep.subr.mxu0 0.0
    %317 = vmatpush1.msra.mxu0 0.0
    %318 = vmatprep.subr.mxu0 0.0
    %319 = vmatpush1.msra.mxu0 0.0
    %320 = vmatprep.subr.mxu0 0.0
    %321 = vmatpush1.msra.mxu0 0.0
    %322 = vmatprep.subr.mxu0 0.0
    %323 = vmatpush1.msra.mxu0 0.0
    %324 = vmatprep.subr.mxu0 0.0
    %325 = vmatpush1.msra.mxu0 0.0
    %326 = vmatprep.subr.mxu0 0.0
    %327 = vmatpush1.msra.mxu0 0.0
    %328 = vmatprep.subr.mxu0 0.0
    %329 = vmatpush1.msra.mxu0 0.0
    %330 = vmatprep.subr.mxu0 0.0
    %331 = vmatpush1.msra.mxu0 0.0
    %332 = vmatprep.subr.mxu0 0.0
    %333 = vmatpush1.msra.mxu0 0.0
    %334 = vmatprep.subr.mxu0 0.0
    %335 = vmatpush1.msra.mxu0 0.0
    %336 = vmatprep.subr.mxu0 0.0
    %337 = vmatpush1.msra.mxu0 0.0
    %338 = vmatprep.subr.mxu0 0.0
    %339 = vmatpush1.msra.mxu0 0.0
    %340 = vmatprep.subr.mxu0 0.0
    %341 = vmatpush1.msra.mxu0 0.0
    %342 = vmatprep.subr.mxu0 0.0
    %343 = vmatpush1.msra.mxu0 0.0
    %344 = vmatprep.mubr.f32.mxu0 0.0
    %345 = vmatmul.mubr.f32.gmra.mrb[0].mxu0 %v278
    %v346 = vpop.f32.mrb[0].mxu0
    %v347 = vadd.f32 0.0, %v346
    %v348 = vpop.f32.mrb[0].mxu0
    %349 = vdwg.mxu0
    %v351 = vrot.slane %v347, 7
    %v353 = vadd.f32 %v150, %v351
    %v354 = vxor.u32 %v353, 2147483648
    %v355 = vmul.f32 %v354, 1.442695
    %v356 = vpow.pop %v355
    %v357 = vadd.f32 %v356, 1.0
    %v358 = vrcp.pop %v357
    %v359 = vmul.f32 1.0, %v358
    %v360 = vtanh.pop %v353
    %v362 = vrot.slane %v258, 7
    %v364 = vmul.f32 %v359, %v362
    %366 = vrot.lane.b32.xlu0 %v360, 64
    %v367 = vpop.permute.xlu0 %366
    %v369 = vmul.f32 %v359, %v367
    %371 = vrot.lane.b32.xlu0 %v369, 32
    %v372 = vpop.permute.xlu0 %371
    %v374 = vadd.f32 %v364, %v372
    %v375 = vtanh.pop %v374
    %377 = vrot.lane.b32.xlu0 %v375, 64
    %v378 = vpop.permute.xlu0 %377
    %v380 = vmul.f32 %v359, %v378
    %v381 = vand.u32 2147483647, %v380
    %v382 = vadd.f32 %v381, 0.0
    %v383 = vrcp.pop %v382
    %v384 = vmul.f32 %v380, %v383
    %386 = vrot.lane.b32.xlu0 %v384, 32
    %v387 = vpop.permute.xlu0 %386
    %vm389 = vcmask 254977
    %390 = vst.msk [vmem:[#allocation8] sm:$0x2] %vm389, %v387
    %v392 = vrot.slane %v380, 1
    %393 = vrot.lane.b32.xlu0 %v392, 32
    %v394 = vpop.permute.xlu0 %393
    %v395 = vsel %vm79, %v394, 0
    %397 = vmatprep.subr.mxu0 0.0
    %398 = vmatpush1.msra.mxu0 %v153
    %399 = vmatprep.subr.mxu0 0.0
    %400 = vmatpush1.msra.mxu0 %v154
    %401 = vmatprep.subr.mxu0 0.0
    %402 = vmatpush1.msra.mxu0 %v155
    %403 = vmatprep.subr.mxu0 0.0
    %404 = vmatpush1.msra.mxu0 %v156
    %405 = vmatprep.subr.mxu0 0.0
    %406 = vmatpush1.msra.mxu0 0.0
    %407 = vmatprep.subr.mxu0 0.0
    %408 = vmatpush1.msra.mxu0 0.0
    %409 = vmatprep.subr.mxu0 0.0
    %410 = vmatpush1.msra.mxu0 0.0
    %411 = vmatprep.subr.mxu0 0.0
    %412 = vmatpush1.msra.mxu0 0.0
    %413 = vmatprep.subr.mxu0 0.0
    %414 = vmatpush1.msra.mxu0 0.0
    %415 = vmatprep.subr.mxu0 0.0
    %416 = vmatpush1.msra.mxu0 0.0
    %417 = vmatprep.subr.mxu0 0.0
    %418 = vmatpush1.msra.mxu0 0.0
    %419 = vmatprep.subr.mxu0 0.0
    %420 = vmatpush1.msra.mxu0 0.0
    %421 = vmatprep.subr.mxu0 0.0
    %422 = vmatpush1.msra.mxu0 0.0
    %423 = vmatprep.subr.mxu0 0.0
    %424 = vmatpush1.msra.mxu0 0.0
    %425 = vmatprep.subr.mxu0 0.0
    %426 = vmatpush1.msra.mxu0 0.0
    %427 = vmatprep.subr.mxu0 0.0
    %428 = vmatpush1.msra.mxu0 0.0
    %429 = vmatprep.subr.mxu0 0.0
    %430 = vmatpush1.msra.mxu0 0.0
    %431 = vmatprep.subr.mxu0 0.0
    %432 = vmatpush1.msra.mxu0 0.0
    %433 = vmatprep.subr.mxu0 0.0
    %434 = vmatpush1.msra.mxu0 0.0
    %435 = vmatprep.subr.mxu0 0.0
    %436 = vmatpush1.msra.mxu0 0.0
    %437 = vmatprep.subr.mxu0 0.0
    %438 = vmatpush1.msra.mxu0 0.0
    %439 = vmatprep.subr.mxu0 0.0
    %440 = vmatpush1.msra.mxu0 0.0
    %441 = vmatprep.subr.mxu0 0.0
    %442 = vmatpush1.msra.mxu0 0.0
    %443 = vmatprep.subr.mxu0 0.0
    %444 = vmatpush1.msra.mxu0 0.0
    %445 = vmatprep.subr.mxu0 0.0
    %446 = vmatpush1.msra.mxu0 0.0
    %447 = vmatprep.subr.mxu0 0.0
    %448 = vmatpush1.msra.mxu0 0.0
    %449 = vmatprep.subr.mxu0 0.0
    %450 = vmatpush1.msra.mxu0 0.0
    %451 = vmatprep.subr.mxu0 0.0
    %452 = vmatpush1.msra.mxu0 0.0
    %453 = vmatprep.subr.mxu0 0.0
    %454 = vmatpush1.msra.mxu0 0.0
    %455 = vmatprep.subr.mxu0 0.0
    %456 = vmatpush1.msra.mxu0 0.0
    %457 = vmatprep.subr.mxu0 0.0
    %458 = vmatpush1.msra.mxu0 0.0
    %459 = vmatprep.subr.mxu0 0.0
    %460 = vmatpush1.msra.mxu0 0.0
    %461 = vmatprep.mubr.f32.mxu0 0.0
    %462 = vmatmul.mubr.f32.gmra.mrb[0].mxu0 %v395
    %v463 = vpop.f32.mrb[0].mxu0
    %v464 = vadd.f32 0.0, %v463
    %v465 = vpop.f32.mrb[0].mxu0
    %466 = vdwg.mxu0
    %v468 = vrot.slane %v464, 6
    %v470 = vadd.f32 %v150, %v468
    %v471 = vxor.u32 %v470, 2147483648
    %v472 = vmul.f32 %v471, 1.442695
    %v473 = vpow.pop %v472
    %v474 = vadd.f32 %v473, 1.0
    %v475 = vrcp.pop %v474
    %v476 = vmul.f32 1.0, %v475
    %v477 = vtanh.pop %v470
    %v479 = vrot.slane %v374, 7
    %v481 = vmul.f32 %v476, %v479
    %483 = vrot.lane.b32.xlu0 %v477, 64
    %v484 = vpop.permute.xlu0 %483
    %v486 = vmul.f32 %v476, %v484
    %488 = vrot.lane.b32.xlu0 %v486, 32
    %v489 = vpop.permute.xlu0 %488
    %v491 = vadd.f32 %v481, %v489
    %v492 = vtanh.pop %v491
    %494 = vrot.lane.b32.xlu0 %v492, 64
    %v495 = vpop.permute.xlu0 %494
    %v497 = vmul.f32 %v476, %v495
    %v498 = vand.u32 2147483647, %v497
    %v499 = vadd.f32 %v498, 0.0
    %v500 = vrcp.pop %v499
    %v501 = vmul.f32 %v497, %v500
    %503 = vrot.lane.b32.xlu0 %v501, 32
    %v504 = vpop.permute.xlu0 %503
    %vm506 = vcmask 256002
    %507 = vst.msk [vmem:[#allocation8] sm:$0x4] %vm506, %v504
    %v509 = vrot.slane %v497, 2
    %510 = vrot.lane.b32.xlu0 %v509, 32
    %v511 = vpop.permute.xlu0 %510
    %v512 = vsel %vm79, %v511, 0
    %514 = vmatprep.subr.mxu0 0.0
    %515 = vmatpush1.msra.mxu0 %v153
    %516 = vmatprep.subr.mxu0 0.0
    %517 = vmatpush1.msra.mxu0 %v154
    %518 = vmatprep.subr.mxu0 0.0
    %519 = vmatpush1.msra.mxu0 %v155
    %520 = vmatprep.subr.mxu0 0.0
    %521 = vmatpush1.msra.mxu0 %v156
    %522 = vmatprep.subr.mxu0 0.0
    %523 = vmatpush1.msra.mxu0 0.0
    %524 = vmatprep.subr.mxu0 0.0
    %525 = vmatpush1.msra.mxu0 0.0
    %526 = vmatprep.subr.mxu0 0.0
    %527 = vmatpush1.msra.mxu0 0.0
    %528 = vmatprep.subr.mxu0 0.0
    %529 = vmatpush1.msra.mxu0 0.0
    %530 = vmatprep.subr.mxu0 0.0
    %531 = vmatpush1.msra.mxu0 0.0
    %532 = vmatprep.subr.mxu0 0.0
    %533 = vmatpush1.msra.mxu0 0.0
    %534 = vmatprep.subr.mxu0 0.0
    %535 = vmatpush1.msra.mxu0 0.0
    %536 = vmatprep.subr.mxu0 0.0
    %537 = vmatpush1.msra.mxu0 0.0
    %538 = vmatprep.subr.mxu0 0.0
    %539 = vmatpush1.msra.mxu0 0.0
    %540 = vmatprep.subr.mxu0 0.0
    %541 = vmatpush1.msra.mxu0 0.0
    %542 = vmatprep.subr.mxu0 0.0
    %543 = vmatpush1.msra.mxu0 0.0
    %544 = vmatprep.subr.mxu0 0.0
    %545 = vmatpush1.msra.mxu0 0.0
    %546 = vmatprep.subr.mxu0 0.0
    %547 = vmatpush1.msra.mxu0 0.0
    %548 = vmatprep.subr.mxu0 0.0
    %549 = vmatpush1.msra.mxu0 0.0
    %550 = vmatprep.subr.mxu0 0.0
    %551 = vmatpush1.msra.mxu0 0.0
    %552 = vmatprep.subr.mxu0 0.0
    %553 = vmatpush1.msra.mxu0 0.0
    %554 = vmatprep.subr.mxu0 0.0
    %555 = vmatpush1.msra.mxu0 0.0
    %556 = vmatprep.subr.mxu0 0.0
    %557 = vmatpush1.msra.mxu0 0.0
    %558 = vmatprep.subr.mxu0 0.0
    %559 = vmatpush1.msra.mxu0 0.0
    %560 = vmatprep.subr.mxu0 0.0
    %561 = vmatpush1.msra.mxu0 0.0
    %562 = vmatprep.subr.mxu0 0.0
    %563 = vmatpush1.msra.mxu0 0.0
    %564 = vmatprep.subr.mxu0 0.0
    %565 = vmatpush1.msra.mxu0 0.0
    %566 = vmatprep.subr.mxu0 0.0
    %567 = vmatpush1.msra.mxu0 0.0
    %568 = vmatprep.subr.mxu0 0.0
    %569 = vmatpush1.msra.mxu0 0.0
    %570 = vmatprep.subr.mxu0 0.0
    %571 = vmatpush1.msra.mxu0 0.0
    %572 = vmatprep.subr.mxu0 0.0
    %573 = vmatpush1.msra.mxu0 0.0
    %574 = vmatprep.subr.mxu0 0.0
    %575 = vmatpush1.msra.mxu0 0.0
    %576 = vmatprep.subr.mxu0 0.0
    %577 = vmatpush1.msra.mxu0 0.0
    %578 = vmatprep.mubr.f32.mxu0 0.0
    %579 = vmatmul.mubr.f32.gmra.mrb[0].mxu0 %v512
    %v580 = vpop.f32.mrb[0].mxu0
    %v581 = vadd.f32 0.0, %v580
    %v582 = vpop.f32.mrb[0].mxu0
    %583 = vdwg.mxu0
    %v585 = vrot.slane %v581, 5
    %v587 = vadd.f32 %v150, %v585
    %v588 = vxor.u32 %v587, 2147483648
    %v589 = vmul.f32 %v588, 1.442695
    %v590 = vpow.pop %v589
    %v591 = vadd.f32 %v590, 1.0
    %v592 = vrcp.pop %v591
    %v593 = vmul.f32 1.0, %v592
    %v594 = vtanh.pop %v587
    %v596 = vrot.slane %v491, 7
    %v598 = vmul.f32 %v593, %v596
    %600 = vrot.lane.b32.xlu0 %v594, 64
    %v601 = vpop.permute.xlu0 %600
    %v603 = vmul.f32 %v593, %v601
    %605 = vrot.lane.b32.xlu0 %v603, 32
    %v606 = vpop.permute.xlu0 %605
    %v608 = vadd.f32 %v598, %v606
    %v609 = vtanh.pop %v608
    %611 = vrot.lane.b32.xlu0 %v609, 64
    %v612 = vpop.permute.xlu0 %611
    %v614 = vmul.f32 %v593, %v612
    %v615 = vand.u32 2147483647, %v614
    %v616 = vadd.f32 %v615, 0.0
    %v617 = vrcp.pop %v616
    %v618 = vmul.f32 %v614, %v617
    %620 = vrot.lane.b32.xlu0 %v618, 32
    %v621 = vpop.permute.xlu0 %620
    %vm623 = vcmask 257027
    %624 = vst.msk [vmem:[#allocation8] sm:$0x8] %vm623, %v621
    %v626 = vrot.slane %v614, 3
    %627 = vrot.lane.b32.xlu0 %v626, 32
    %v628 = vpop.permute.xlu0 %627
    %v629 = vsel %vm79, %v628, 0
    %631 = vmatprep.subr.mxu0 0.0
    %632 = vmatpush1.msra.mxu0 %v153
    %633 = vmatprep.subr.mxu0 0.0
    %634 = vmatpush1.msra.mxu0 %v154
    %635 = vmatprep.subr.mxu0 0.0
    %636 = vmatpush1.msra.mxu0 %v155
    %637 = vmatprep.subr.mxu0 0.0
    %638 = vmatpush1.msra.mxu0 %v156
    %639 = vmatprep.subr.mxu0 0.0
    %640 = vmatpush1.msra.mxu0 0.0
    %641 = vmatprep.subr.mxu0 0.0
    %642 = vmatpush1.msra.mxu0 0.0
    %643 = vmatprep.subr.mxu0 0.0
    %644 = vmatpush1.msra.mxu0 0.0
    %645 = vmatprep.subr.mxu0 0.0
    %646 = vmatpush1.msra.mxu0 0.0
    %647 = vmatprep.subr.mxu0 0.0
    %648 = vmatpush1.msra.mxu0 0.0
    %649 = vmatprep.subr.mxu0 0.0
    %650 = vmatpush1.msra.mxu0 0.0
    %651 = vmatprep.subr.mxu0 0.0
    %652 = vmatpush1.msra.mxu0 0.0
    %653 = vmatprep.subr.mxu0 0.0
    %654 = vmatpush1.msra.mxu0 0.0
    %655 = vmatprep.subr.mxu0 0.0
    %656 = vmatpush1.msra.mxu0 0.0
    %657 = vmatprep.subr.mxu0 0.0
    %658 = vmatpush1.msra.mxu0 0.0
    %659 = vmatprep.subr.mxu0 0.0
    %660 = vmatpush1.msra.mxu0 0.0
    %661 = vmatprep.subr.mxu0 0.0
    %662 = vmatpush1.msra.mxu0 0.0
    %663 = vmatprep.subr.mxu0 0.0
    %664 = vmatpush1.msra.mxu0 0.0
    %665 = vmatprep.subr.mxu0 0.0
    %666 = vmatpush1.msra.mxu0 0.0
    %667 = vmatprep.subr.mxu0 0.0
    %668 = vmatpush1.msra.mxu0 0.0
    %669 = vmatprep.subr.mxu0 0.0
    %670 = vmatpush1.msra.mxu0 0.0
    %671 = vmatprep.subr.mxu0 0.0
    %672 = vmatpush1.msra.mxu0 0.0
    %673 = vmatprep.subr.mxu0 0.0
    %674 = vmatpush1.msra.mxu0 0.0
    %675 = vmatprep.subr.mxu0 0.0
    %676 = vmatpush1.msra.mxu0 0.0
    %677 = vmatprep.subr.mxu0 0.0
    %678 = vmatpush1.msra.mxu0 0.0
    %679 = vmatprep.subr.mxu0 0.0
    %680 = vmatpush1.msra.mxu0 0.0
    %681 = vmatprep.subr.mxu0 0.0
    %682 = vmatpush1.msra.mxu0 0.0
    %683 = vmatprep.subr.mxu0 0.0
    %684 = vmatpush1.msra.mxu0 0.0
    %685 = vmatprep.subr.mxu0 0.0
    %686 = vmatpush1.msra.mxu0 0.0
    %687 = vmatprep.subr.mxu0 0.0
    %688 = vmatpush1.msra.mxu0 0.0
    %689 = vmatprep.subr.mxu0 0.0
    %690 = vmatpush1.msra.mxu0 0.0
    %691 = vmatprep.subr.mxu0 0.0
    %692 = vmatpush1.msra.mxu0 0.0
    %693 = vmatprep.subr.mxu0 0.0
    %694 = vmatpush1.msra.mxu0 0.0
    %695 = vmatprep.mubr.f32.mxu0 0.0
    %696 = vmatmul.mubr.f32.gmra.mrb[0].mxu0 %v629
    %v697 = vpop.f32.mrb[0].mxu0
    %v698 = vadd.f32 0.0, %v697
    %v699 = vpop.f32.mrb[0].mxu0
    %700 = vdwg.mxu0
    %v702 = vrot.slane %v698, 4
    %v704 = vadd.f32 %v150, %v702
    %v705 = vxor.u32 %v704, 2147483648
    %v706 = vmul.f32 %v705, 1.442695
    %v707 = vpow.pop %v706
    %v708 = vadd.f32 %v707, 1.0
    %v709 = vrcp.pop %v708
    %v710 = vmul.f32 1.0, %v709
    %v711 = vtanh.pop %v704
    %v713 = vrot.slane %v608, 7
    %v715 = vmul.f32 %v710, %v713
    %717 = vrot.lane.b32.xlu0 %v711, 64
    %v718 = vpop.permute.xlu0 %717
    %v720 = vmul.f32 %v710, %v718
    %722 = vrot.lane.b32.xlu0 %v720, 32
    %v723 = vpop.permute.xlu0 %722
    %v725 = vadd.f32 %v715, %v723
    %v726 = vtanh.pop %v725
    %728 = vrot.lane.b32.xlu0 %v726, 64
    %v729 = vpop.permute.xlu0 %728
    %v731 = vmul.f32 %v710, %v729
    %v732 = vand.u32 2147483647, %v731
    %v733 = vadd.f32 %v732, 0.0
    %v734 = vrcp.pop %v733
    %v735 = vmul.f32 %v731, %v734
    %737 = vrot.lane.b32.xlu0 %v735, 32
    %v738 = vpop.permute.xlu0 %737
    %vm740 = vcmask 258052
    %741 = vst.msk [vmem:[#allocation8] sm:$0x10] %vm740, %v738
    %v743 = vrot.slane %v731, 4
    %744 = vrot.lane.b32.xlu0 %v743, 32
    %v745 = vpop.permute.xlu0 %744
    %v746 = vsel %vm79, %v745, 0
    %748 = vmatprep.subr.mxu0 0.0
    %749 = vmatpush1.msra.mxu0 %v153
    %750 = vmatprep.subr.mxu0 0.0
    %751 = vmatpush1.msra.mxu0 %v154
    %752 = vmatprep.subr.mxu0 0.0
    %753 = vmatpush1.msra.mxu0 %v155
    %754 = vmatprep.subr.mxu0 0.0
    %755 = vmatpush1.msra.mxu0 %v156
    %756 = vmatprep.subr.mxu0 0.0
    %757 = vmatpush1.msra.mxu0 0.0
    %758 = vmatprep.subr.mxu0 0.0
    %759 = vmatpush1.msra.mxu0 0.0
    %760 = vmatprep.subr.mxu0 0.0
    %761 = vmatpush1.msra.mxu0 0.0
    %762 = vmatprep.subr.mxu0 0.0
    %763 = vmatpush1.msra.mxu0 0.0
    %764 = vmatprep.subr.mxu0 0.0
    %765 = vmatpush1.msra.mxu0 0.0
    %766 = vmatprep.subr.mxu0 0.0
    %767 = vmatpush1.msra.mxu0 0.0
    %768 = vmatprep.subr.mxu0 0.0
    %769 = vmatpush1.msra.mxu0 0.0
    %770 = vmatprep.subr.mxu0 0.0
    %771 = vmatpush1.msra.mxu0 0.0
    %772 = vmatprep.subr.mxu0 0.0
    %773 = vmatpush1.msra.mxu0 0.0
    %774 = vmatprep.subr.mxu0 0.0
    %775 = vmatpush1.msra.mxu0 0.0
    %776 = vmatprep.subr.mxu0 0.0
    %777 = vmatpush1.msra.mxu0 0.0
    %778 = vmatprep.subr.mxu0 0.0
    %779 = vmatpush1.msra.mxu0 0.0
    %780 = vmatprep.subr.mxu0 0.0
    %781 = vmatpush1.msra.mxu0 0.0
    %782 = vmatprep.subr.mxu0 0.0
    %783 = vmatpush1.msra.mxu0 0.0
    %784 = vmatprep.subr.mxu0 0.0
    %785 = vmatpush1.msra.mxu0 0.0
    %786 = vmatprep.subr.mxu0 0.0
    %787 = vmatpush1.msra.mxu0 0.0
    %788 = vmatprep.subr.mxu0 0.0
    %789 = vmatpush1.msra.mxu0 0.0
    %790 = vmatprep.subr.mxu0 0.0
    %791 = vmatpush1.msra.mxu0 0.0
    %792 = vmatprep.subr.mxu0 0.0
    %793 = vmatpush1.msra.mxu0 0.0
    %794 = vmatprep.subr.mxu0 0.0
    %795 = vmatpush1.msra.mxu0 0.0
    %796 = vmatprep.subr.mxu0 0.0
    %797 = vmatpush1.msra.mxu0 0.0
    %798 = vmatprep.subr.mxu0 0.0
    %799 = vmatpush1.msra.mxu0 0.0
    %800 = vmatprep.subr.mxu0 0.0
    %801 = vmatpush1.msra.mxu0 0.0
    %802 = vmatprep.subr.mxu0 0.0
    %803 = vmatpush1.msra.mxu0 0.0
    %804 = vmatprep.subr.mxu0 0.0
    %805 = vmatpush1.msra.mxu0 0.0
    %806 = vmatprep.subr.mxu0 0.0
    %807 = vmatpush1.msra.mxu0 0.0
    %808 = vmatprep.subr.mxu0 0.0
    %809 = vmatpush1.msra.mxu0 0.0
    %810 = vmatprep.subr.mxu0 0.0
    %811 = vmatpush1.msra.mxu0 0.0
    %812 = vmatprep.mubr.f32.mxu0 0.0
    %813 = vmatmul.mubr.f32.gmra.mrb[0].mxu0 %v746
    %v814 = vpop.f32.mrb[0].mxu0
    %v815 = vadd.f32 0.0, %v814
    %v816 = vpop.f32.mrb[0].mxu0
    %817 = vdwg.mxu0
    %v819 = vrot.slane %v815, 3
    %v821 = vadd.f32 %v150, %v819
    %v822 = vxor.u32 %v821, 2147483648
    %v823 = vmul.f32 %v822, 1.442695
    %v824 = vpow.pop %v823
    %v825 = vadd.f32 %v824, 1.0
    %v826 = vrcp.pop %v825
    %v827 = vmul.f32 1.0, %v826
    %v828 = vtanh.pop %v821
    %v830 = vrot.slane %v725, 7
    %v832 = vmul.f32 %v827, %v830
    %834 = vrot.lane.b32.xlu0 %v828, 64
    %v835 = vpop.permute.xlu0 %834
    %v837 = vmul.f32 %v827, %v835
    %839 = vrot.lane.b32.xlu0 %v837, 32
    %v840 = vpop.permute.xlu0 %839
    %v842 = vadd.f32 %v832, %v840
    %v843 = vtanh.pop %v842
    %845 = vrot.lane.b32.xlu0 %v843, 64
    %v846 = vpop.permute.xlu0 %845
    %v848 = vmul.f32 %v827, %v846
    %v849 = vand.u32 2147483647, %v848
    %v850 = vadd.f32 %v849, 0.0
    %v851 = vrcp.pop %v850
    %v852 = vmul.f32 %v848, %v851
    %854 = vrot.lane.b32.xlu0 %v852, 32
    %v855 = vpop.permute.xlu0 %854
    %vm857 = vcmask 259077
    %858 = vst.msk [vmem:[#allocation8] sm:$0x20] %vm857, %v855
    %v860 = vrot.slane %v848, 5
    %861 = vrot.lane.b32.xlu0 %v860, 32
    %v862 = vpop.permute.xlu0 %861
    %v863 = vsel %vm79, %v862, 0
    %865 = vmatprep.subr.mxu0 0.0
    %866 = vmatpush1.msra.mxu0 %v153
    %867 = vmatprep.subr.mxu0 0.0
    %868 = vmatpush1.msra.mxu0 %v154
    %869 = vmatprep.subr.mxu0 0.0
    %870 = vmatpush1.msra.mxu0 %v155
    %871 = vmatprep.subr.mxu0 0.0
    %872 = vmatpush1.msra.mxu0 %v156
    %873 = vmatprep.subr.mxu0 0.0
    %874 = vmatpush1.msra.mxu0 0.0
    %875 = vmatprep.subr.mxu0 0.0
    %876 = vmatpush1.msra.mxu0 0.0
    %877 = vmatprep.subr.mxu0 0.0
    %878 = vmatpush1.msra.mxu0 0.0
    %879 = vmatprep.subr.mxu0 0.0
    %880 = vmatpush1.msra.mxu0 0.0
    %881 = vmatprep.subr.mxu0 0.0
    %882 = vmatpush1.msra.mxu0 0.0
    %883 = vmatprep.subr.mxu0 0.0
    %884 = vmatpush1.msra.mxu0 0.0
    %885 = vmatprep.subr.mxu0 0.0
    %886 = vmatpush1.msra.mxu0 0.0
    %887 = vmatprep.subr.mxu0 0.0
    %888 = vmatpush1.msra.mxu0 0.0
    %889 = vmatprep.subr.mxu0 0.0
    %890 = vmatpush1.msra.mxu0 0.0
    %891 = vmatprep.subr.mxu0 0.0
    %892 = vmatpush1.msra.mxu0 0.0
    %893 = vmatprep.subr.mxu0 0.0
    %894 = vmatpush1.msra.mxu0 0.0
    %895 = vmatprep.subr.mxu0 0.0
    %896 = vmatpush1.msra.mxu0 0.0
    %897 = vmatprep.subr.mxu0 0.0
    %898 = vmatpush1.msra.mxu0 0.0
    %899 = vmatprep.subr.mxu0 0.0
    %900 = vmatpush1.msra.mxu0 0.0
    %901 = vmatprep.subr.mxu0 0.0
    %902 = vmatpush1.msra.mxu0 0.0
    %903 = vmatprep.subr.mxu0 0.0
    %904 = vmatpush1.msra.mxu0 0.0
    %905 = vmatprep.subr.mxu0 0.0
    %906 = vmatpush1.msra.mxu0 0.0
    %907 = vmatprep.subr.mxu0 0.0
    %908 = vmatpush1.msra.mxu0 0.0
    %909 = vmatprep.subr.mxu0 0.0
    %910 = vmatpush1.msra.mxu0 0.0
    %911 = vmatprep.subr.mxu0 0.0
    %912 = vmatpush1.msra.mxu0 0.0
    %913 = vmatprep.subr.mxu0 0.0
    %914 = vmatpush1.msra.mxu0 0.0
    %915 = vmatprep.subr.mxu0 0.0
    %916 = vmatpush1.msra.mxu0 0.0
    %917 = vmatprep.subr.mxu0 0.0
    %918 = vmatpush1.msra.mxu0 0.0
    %919 = vmatprep.subr.mxu0 0.0
    %920 = vmatpush1.msra.mxu0 0.0
    %921 = vmatprep.subr.mxu0 0.0
    %922 = vmatpush1.msra.mxu0 0.0
    %923 = vmatprep.subr.mxu0 0.0
    %924 = vmatpush1.msra.mxu0 0.0
    %925 = vmatprep.subr.mxu0 0.0
    %926 = vmatpush1.msra.mxu0 0.0
    %927 = vmatprep.subr.mxu0 0.0
    %928 = vmatpush1.msra.mxu0 0.0
    %929 = vmatprep.mubr.f32.mxu0 0.0
    %930 = vmatmul.mubr.f32.gmra.mrb[0].mxu0 %v863
    %v931 = vpop.f32.mrb[0].mxu0
    %v932 = vadd.f32 0.0, %v931
    %v933 = vpop.f32.mrb[0].mxu0
    %934 = vdwg.mxu0
    %v936 = vrot.slane %v932, 2
    %v938 = vadd.f32 %v150, %v936
    %v939 = vxor.u32 %v938, 2147483648
    %v940 = vmul.f32 %v939, 1.442695
    %v941 = vpow.pop %v940
    %v942 = vadd.f32 %v941, 1.0
    %v943 = vrcp.pop %v942
    %v944 = vmul.f32 1.0, %v943
    %v945 = vtanh.pop %v938
    %v947 = vrot.slane %v842, 7
    %v949 = vmul.f32 %v944, %v947
    %951 = vrot.lane.b32.xlu0 %v945, 64
    %v952 = vpop.permute.xlu0 %951
    %v954 = vmul.f32 %v944, %v952
    %956 = vrot.lane.b32.xlu0 %v954, 32
    %v957 = vpop.permute.xlu0 %956
    %v959 = vadd.f32 %v949, %v957
    %v960 = vtanh.pop %v959
    %962 = vrot.lane.b32.xlu0 %v960, 64
    %v963 = vpop.permute.xlu0 %962
    %v965 = vmul.f32 %v944, %v963
    %v966 = vand.u32 2147483647, %v965
    %v967 = vadd.f32 %v966, 0.0
    %v968 = vrcp.pop %v967
    %v969 = vmul.f32 %v965, %v968
    %971 = vrot.lane.b32.xlu0 %v969, 32
    %v972 = vpop.permute.xlu0 %971
    %vm974 = vcmask 260102
    %975 = vst.msk [vmem:[#allocation8] sm:$0x40] %vm974, %v972
    %v977 = vrot.slane %v965, 6
    %978 = vrot.lane.b32.xlu0 %v977, 32
    %v979 = vpop.permute.xlu0 %978
    %v980 = vsel %vm79, %v979, 0
    %982 = vmatprep.subr.mxu0 0.0
    %983 = vmatpush1.msra.mxu0 %v153
    %984 = vmatprep.subr.mxu0 0.0
    %985 = vmatpush1.msra.mxu0 %v154
    %986 = vmatprep.subr.mxu0 0.0
    %987 = vmatpush1.msra.mxu0 %v155
    %988 = vmatprep.subr.mxu0 0.0
    %989 = vmatpush1.msra.mxu0 %v156
    %990 = vmatprep.subr.mxu0 0.0
    %991 = vmatpush1.msra.mxu0 0.0
    %992 = vmatprep.subr.mxu0 0.0
    %993 = vmatpush1.msra.mxu0 0.0
    %994 = vmatprep.subr.mxu0 0.0
    %995 = vmatpush1.msra.mxu0 0.0
    %996 = vmatprep.subr.mxu0 0.0
    %997 = vmatpush1.msra.mxu0 0.0
    %998 = vmatprep.subr.mxu0 0.0
    %999 = vmatpush1.msra.mxu0 0.0
    %1000 = vmatprep.subr.mxu0 0.0
    %1001 = vmatpush1.msra.mxu0 0.0
    %1002 = vmatprep.subr.mxu0 0.0
    %1003 = vmatpush1.msra.mxu0 0.0
    %1004 = vmatprep.subr.mxu0 0.0
    %1005 = vmatpush1.msra.mxu0 0.0
    %1006 = vmatprep.subr.mxu0 0.0
    %1007 = vmatpush1.msra.mxu0 0.0
    %1008 = vmatprep.subr.mxu0 0.0
    %1009 = vmatpush1.msra.mxu0 0.0
    %1010 = vmatprep.subr.mxu0 0.0
    %1011 = vmatpush1.msra.mxu0 0.0
    %1012 = vmatprep.subr.mxu0 0.0
    %1013 = vmatpush1.msra.mxu0 0.0
    %1014 = vmatprep.subr.mxu0 0.0
    %1015 = vmatpush1.msra.mxu0 0.0
    %1016 = vmatprep.subr.mxu0 0.0
    %1017 = vmatpush1.msra.mxu0 0.0
    %1018 = vmatprep.subr.mxu0 0.0
    %1019 = vmatpush1.msra.mxu0 0.0
    %1020 = vmatprep.subr.mxu0 0.0
    %1021 = vmatpush1.msra.mxu0 0.0
    %1022 = vmatprep.subr.mxu0 0.0
    %1023 = vmatpush1.msra.mxu0 0.0
    %1024 = vmatprep.subr.mxu0 0.0
    %1025 = vmatpush1.msra.mxu0 0.0
    %1026 = vmatprep.subr.mxu0 0.0
    %1027 = vmatpush1.msra.mxu0 0.0
    %1028 = vmatprep.subr.mxu0 0.0
    %1029 = vmatpush1.msra.mxu0 0.0
    %1030 = vmatprep.subr.mxu0 0.0
    %1031 = vmatpush1.msra.mxu0 0.0
    %1032 = vmatprep.subr.mxu0 0.0
    %1033 = vmatpush1.msra.mxu0 0.0
    %1034 = vmatprep.subr.mxu0 0.0
    %1035 = vmatpush1.msra.mxu0 0.0
    %1036 = vmatprep.subr.mxu0 0.0
    %1037 = vmatpush1.msra.mxu0 0.0
    %1038 = vmatprep.subr.mxu0 0.0
    %1039 = vmatpush1.msra.mxu0 0.0
    %1040 = vmatprep.subr.mxu0 0.0
    %1041 = vmatpush1.msra.mxu0 0.0
    %1042 = vmatprep.subr.mxu0 0.0
    %1043 = vmatpush1.msra.mxu0 0.0
    %1044 = vmatprep.subr.mxu0 0.0
    %1045 = vmatpush1.msra.mxu0 0.0
    %1046 = vmatprep.mubr.f32.mxu0 0.0
    %1047 = vmatmul.mubr.f32.gmra.mrb[0].mxu0 %v980
    %v1048 = vpop.f32.mrb[0].mxu0
    %v1049 = vadd.f32 0.0, %v1048
    %v1050 = vpop.f32.mrb[0].mxu0
    %1051 = vdwg.mxu0
    %v1053 = vrot.slane %v1049, 1
    %v1055 = vadd.f32 %v150, %v1053
    %v1056 = vxor.u32 %v1055, 2147483648
    %v1057 = vmul.f32 %v1056, 1.442695
    %v1058 = vpow.pop %v1057
    %v1059 = vadd.f32 %v1058, 1.0
    %v1060 = vrcp.pop %v1059
    %v1061 = vmul.f32 1.0, %v1060
    %v1062 = vtanh.pop %v1055
    %v1064 = vrot.slane %v959, 7
    %v1066 = vmul.f32 %v1061, %v1064
    %1068 = vrot.lane.b32.xlu0 %v1062, 64
    %v1069 = vpop.permute.xlu0 %1068
    %v1071 = vmul.f32 %v1061, %v1069
    %1073 = vrot.lane.b32.xlu0 %v1071, 32
    %v1074 = vpop.permute.xlu0 %1073
    %v1076 = vadd.f32 %v1066, %v1074
    %v1077 = vtanh.pop %v1076
    %1079 = vrot.lane.b32.xlu0 %v1077, 64
    %v1080 = vpop.permute.xlu0 %1079
    %v1082 = vmul.f32 %v1061, %v1080
    %v1083 = vand.u32 2147483647, %v1082
    %v1084 = vadd.f32 %v1083, 0.0
    %v1085 = vrcp.pop %v1084
    %v1086 = vmul.f32 %v1082, %v1085
    %1088 = vrot.lane.b32.xlu0 %v1086, 32
    %v1089 = vpop.permute.xlu0 %1088
    %vm1091 = vcmask 261127
    %1092 = vst.msk [vmem:[#allocation8] sm:$0x80] %vm1091, %v1089
    %1094 = vrot.lane.b32.xlu0 %v1082, 32
    %v1095 = vpop.permute.xlu0 %1094
    %1097 = vst.msk [vmem:[#allocation9 - $0x7] sm:$0x80] %vm1091, %v1095
    %1099 = vrot.lane.b32.xlu0 %v1076, 96
    %v1100 = vpop.permute.xlu0 %1099
    %1102 = vst.msk [vmem:[#allocation11 - $0x7] sm:$0x80] %vm1091, %v1100
    // Predicated region
    $region38: #{tpu_custom_call.1} parent=1 // pred_check
      _
    $region39: #{tpu_custom_call.1} parent=1 // pred_check_branch
      %1104 = sbr.rel (0) target = $region41
    $region40: #{tpu_custom_call.1} parent=1 // pred_region
      %s1106 = ssub.s32 128, 128
      %1107 = vsyncadd [#allocation4], %s1106
      %s1109 = sshll.u32 [#allocation8], 4
      %s1110 = int_to_ptr.vmem [resolvable:$true] %s1109
      %1112 = dma.vmem_to_hbm [thread:$0]  %s1110, 128, %s6, [#allocation4]
    $region41: #{tpu_custom_call.1} parent=1 // pred_fallthru
      _
    // Predicated region
    $region42: #{tpu_custom_call.1} parent=1 // pred_check
      _
    $region43: #{tpu_custom_call.1} parent=1 // pred_check_branch
      %1114 = sbr.rel (0) target = $region45
    $region44: #{tpu_custom_call.1} parent=1 // pred_region
      %s1116 = ssub.s32 16, 16
      %1117 = vsyncadd [#allocation10], %s1116
      %s1119 = sshll.u32 [#allocation9], 4
      %s1120 = int_to_ptr.vmem [resolvable:$true] %s1119
      %1122 = dma.vmem_to_hbm [thread:$0]  %s1120, 16, %s7, [#allocation10]
    $region45: #{tpu_custom_call.1} parent=1 // pred_fallthru
      _
    // Predicated region
    $region46: #{tpu_custom_call.1} parent=1 // pred_check
      _
    $region47: #{tpu_custom_call.1} parent=1 // pred_check_branch
      %1124 = sbr.rel (0) target = $region49
    $region48: #{tpu_custom_call.1} parent=1 // pred_region
      %s1126 = ssub.s32 16, 16
      %1127 = vsyncadd [#allocation10], %s1126
      %s1129 = sshll.u32 [#allocation11], 4
      %s1130 = int_to_ptr.vmem [resolvable:$true] %s1129
      %1132 = dma.vmem_to_hbm [thread:$0]  %s1130, 16, %s8, [#allocation10]
    $region49: #{tpu_custom_call.1} parent=1 // pred_fallthru
      _
    // Predicated region
    $region50: #{tpu_custom_call.1} parent=1 // pred_check
      _
    $region51: #{tpu_custom_call.1} parent=1 // pred_check_branch
      %1134 = sbr.rel (0) target = $region53
    $region52: #{tpu_custom_call.1} parent=1 // pred_region
      %1135 = dma.done [#allocation4], 128
    $region53: #{tpu_custom_call.1} parent=1 // pred_fallthru
      _
    // Predicated region
    $region54: #{tpu_custom_call.1} parent=1 // pred_check
      _
    $region55: #{tpu_custom_call.1} parent=1 // pred_check_branch
      %1137 = sbr.rel (0) target = $region57
    $region56: #{tpu_custom_call.1} parent=1 // pred_region
      %1138 = dma.done [#allocation10], 16
    $region57: #{tpu_custom_call.1} parent=1 // pred_fallthru
      _
    // Predicated region
    $region58: #{tpu_custom_call.1} parent=1 // pred_check
      _
    $region59: #{tpu_custom_call.1} parent=1 // pred_check_branch
      %1140 = sbr.rel (0) target = $region61
    $region60: #{tpu_custom_call.1} parent=1 // pred_region
      %1141 = dma.done [#allocation10], 16
    $region61: #{tpu_custom_call.1} parent=1 // pred_fallthru
      _
    %1142 = vsyncpa [#allocation3], 1
    %1143 = vsyncpa [#allocation6], 1
    %1144 = vsyncpa [#allocation4], 1
    %1145 = vsyncpa [#allocation10], 1

</llo_original>
